<compile_context>
chip_gen: v7x
topology: tpu7x:2x2x1
jax: 0.10.0
libtpu: 0.0.40
codegen_flags: <defaults>
</compile_context>

<pallas_src>
import jax
import jax.numpy as jnp
from jax import lax
from jax.experimental import pallas as pl
from jax.experimental.pallas import tpu as pltpu


def _round_up(a, m):
    return ((a + m - 1) // m) * m


def discriminator_kernel(x_ref, w1_ref, b1_ref, w2_ref, b2_ref, o_ref):
    # In-kernel bf16 cast of the activation block (VPU), then fc1 on the MXU
    # with f32 accumulation: (block_m, 784) bf16 @ (784, 128) bf16 -> f32.
    x_bf16 = x_ref[...].astype(jnp.bfloat16)
    h = jnp.dot(x_bf16, w1_ref[...], preferred_element_type=jnp.float32)
    # bias + ReLU on the VPU, f32.
    h = jnp.maximum(h + b1_ref[...], 0.0)
    # fc2: contract w2 (1, 128) against h (block_m, 128) along the hidden dim,
    # producing a lane-dense (1, block_m) result (batch on the lane axis ->
    # unmasked stores).
    z = lax.dot_general(
        w2_ref[...], h,
        dimension_numbers=(((1,), (1,)), ((), ())),
        preferred_element_type=jnp.float32)
    # scalar fc2 bias from SMEM.
    z = z + b2_ref[0, 0]
    # sigmoid: exp + approximate reciprocal both land on the (otherwise idle)
    # EUP.  approx=True introduces ~1e-3 rel error; fine for a discriminator
    # forward, swap to approx=False if the output feeds log()/BCE directly.
    o_ref[...] = pl.reciprocal(1.0 + jnp.exp(-z), approx=True).astype(o_ref.dtype)


def discriminator_forward(x, w1, b1, w2, b2, *, block_m=None):
    """x: (B, ...) flattened to (B, input_dim). Returns sigmoid outputs (B, 1)."""
    B = x.shape[0]
    x2d = x.reshape(B, -1)                      # torch: x.view(x.size(0), -1)
    input_dim = x2d.shape[1]
    hidden = w1.shape[1]
    output_dim = w2.shape[1]
    assert output_dim == 1, "lane-dense output packing assumes output_dim == 1"

    if block_m is None:
        # Big enough to amortize per-step overhead, but keep >= 2-4 grid steps
        # for small batches so v7x can shard the "parallel" batch axis.
        block_m = max(128, min(2048, _round_up(pl.cdiv(B, 4), 128)))
    n_tiles = pl.cdiv(B, block_m)               # last block may be partial

    # Small one-time casts / reshapes on the parameters (not on x).
    w1_bf16 = w1.astype(jnp.bfloat16)
    b1_2d = b1.reshape(1, hidden).astype(jnp.float32)
    w2_row = w2.reshape(1, hidden).astype(jnp.float32)   # (hidden, 1) -> (1, hidden)
    b2_sc = b2.reshape(1, 1).astype(jnp.float32)          # scalar, goes to SMEM

    # Scoped-VMEM headroom: double-buffered f32 x block (784 -> 896 lane pad)
    # plus a fixed margin for the resident weights / output / pipeline state.
    x_block_bytes = block_m * _round_up(input_dim, 128) * 4
    vmem_limit = int(min(2 * x_block_bytes + (8 << 20), 48 << 20))

    cost = pl.CostEstimate(
        flops=2 * B * input_dim * hidden + 2 * B * hidden * output_dim,
        transcendentals=B,                                     # exp per row
        bytes_accessed=(B * input_dim * 4                      # x (f32)
                        + input_dim * hidden * 2               # w1 (bf16)
                        + hidden * 4 + hidden * 4 + 4          # b1, w2, b2
                        + B * 4))                              # output

    out = pl.pallas_call(
        discriminator_kernel,
        out_shape=jax.ShapeDtypeStruct((1, B), jnp.float32),
        grid_spec=pltpu.PrefetchScalarGridSpec(
            num_scalar_prefetch=0,
            grid=(n_tiles,),
            in_specs=[
                # batch-tiled activations (f32 straight from HBM)
                pl.BlockSpec((block_m, input_dim), lambda i: (i, 0)),
                # weights/bias: constant index map -> resident in VMEM
                pl.BlockSpec((input_dim, hidden), lambda i: (0, 0)),
                pl.BlockSpec((1, hidden), lambda i: (0, 0)),
                pl.BlockSpec((1, hidden), lambda i: (0, 0)),
                # scalar fc2 bias in SMEM (no padded VMEM tile / extra DMA)
                pl.BlockSpec(memory_space=pltpu.MemorySpace.SMEM),
            ],
            out_specs=pl.BlockSpec((1, block_m), lambda i: (0, i)),
        ),
        compiler_params=pltpu.CompilerParams(
            dimension_semantics=("parallel",),   # lets v7x shard batch over 2 TCs
            vmem_limit_bytes=vmem_limit),
        cost_estimate=cost,
    )(x2d, w1_bf16, b1_2d, w2_row, b2_sc)

    # Lane-dense (1, B) slab -> (B, 1).
    return out.reshape(B, output_dim)


def init_params(key, input_dim=784, hidden=128, output_dim=1, mu=0.0, sig=0.075):
    # Mirrors Discriminator.weights_init: normal_(mu, sig ** 2) (std = sig**2).
    k1, k2, k3, k4 = jax.random.split(key, 4)
    std = sig ** 2
    w1 = mu + std * jax.random.normal(k1, (input_dim, hidden), jnp.float32)
    b1 = mu + std * jax.random.normal(k2, (hidden,), jnp.float32)
    w2 = mu + std * jax.random.normal(k3, (hidden, output_dim), jnp.float32)
    b2 = mu + std * jax.random.normal(k4, (output_dim,), jnp.float32)
    return w1, b1, w2, b2


if __name__ == "__main__":
    key = jax.random.PRNGKey(0)
    kx, kp = jax.random.split(key)

    # Small MNIST-like batch: (B, C, H, W) = (200, 1, 28, 28) -> flattened 784.
    # B=200 exercises a multi-step grid (block_m auto -> 128, 2 tiles) with a
    # partial last block (no explicit padding anywhere).
    B = 200
    x = jax.random.normal(kx, (B, 1, 28, 28), jnp.float32)
    w1, b1, w2, b2 = init_params(kp)

    y = discriminator_forward(x, w1, b1, w2, b2)
    y = jax.block_until_ready(y)

    # Reference in plain JAX using the same bf16 fc1 cast as the kernel.
    x2d = x.reshape(B, -1)
    h_ref = jnp.maximum(
        jnp.dot(x2d.astype(jnp.bfloat16), w1.astype(jnp.bfloat16),
                preferred_element_type=jnp.float32) + b1, 0.0)
    ref = jax.nn.sigmoid(h_ref @ w2 + b2)

    assert y.shape == (B, 1)
    assert jnp.allclose(y, ref, atol=2e-3, rtol=2e-3)

    print("KERNEL_OK")
</pallas_src>

<mosaic_0001>
module attributes {stable_mosaic.version = 11 : i64} {
  func.func @discriminator_kernel(%arg0: i32, %arg1: memref<128x784xf32, #tpu.memory_space<vmem>>, %arg2: memref<784x128xbf16, #tpu.memory_space<vmem>>, %arg3: memref<1x128xf32, #tpu.memory_space<vmem>>, %arg4: memref<1x128xf32, #tpu.memory_space<vmem>>, %arg5: memref<1x1xf32, #tpu.memory_space<smem>>, %arg6: memref<1x128xf32, #tpu.memory_space<vmem>>) attributes {dimension_semantics = [#tpu.dimension_semantics<parallel>], iteration_bounds = array<i64: 2>, scalar_prefetch = 0 : i64, scratch_operands = 0 : i64, tpu.core_type = #tpu.core_type<tc>, window_params = [{transform_indices = @transform_0, window_bounds = array<i64: 128, 784>}, {pipeline_mode = #tpu.pipeline_mode<synchronous>, transform_indices = @transform_1, window_bounds = array<i64: 784, 128>}, {pipeline_mode = #tpu.pipeline_mode<synchronous>, transform_indices = @transform_2, window_bounds = array<i64: 1, 128>}, {pipeline_mode = #tpu.pipeline_mode<synchronous>, transform_indices = @transform_3, window_bounds = array<i64: 1, 128>}, {transform_indices = @transform_4, window_bounds = array<i64: 1, 1>}, {transform_indices = @transform_5, window_bounds = array<i64: 1, 128>}]} {
    %c0 = arith.constant 0 : index
    %c0_0 = arith.constant 0 : index
    %0 = vector.load %arg1[%c0, %c0_0] : memref<128x784xf32, #tpu.memory_space<vmem>>, vector<128x784xf32>
    %1 = arith.truncf %0 : vector<128x784xf32> to vector<128x784xbf16>
    %c0_1 = arith.constant 0 : index
    %c0_2 = arith.constant 0 : index
    %2 = vector.load %arg2[%c0_1, %c0_2] : memref<784x128xbf16, #tpu.memory_space<vmem>>, vector<784x128xbf16>
    %cst = arith.constant dense<0.000000e+00> : vector<128x128xf32>
    %3 = tpu.matmul %1, %2, %cst {dimension_numbers = #tpu.dot_dimension_numbers<[1], [0], [0], [1], [0, 0, 1, 1], [], []>} : vector<128x784xbf16>, vector<784x128xbf16>, vector<128x128xf32> -> vector<128x128xf32>
    %c0_3 = arith.constant 0 : index
    %c0_4 = arith.constant 0 : index
    %4 = vector.load %arg3[%c0_3, %c0_4] : memref<1x128xf32, #tpu.memory_space<vmem>>, vector<1x128xf32>
    %5 = vector.broadcast %4 : vector<1x128xf32> to vector<128x128xf32>
    %6 = arith.addf %3, %5 : vector<128x128xf32>
    %cst_5 = arith.constant 0.000000e+00 : f32
    %7 = vector.broadcast %cst_5 : f32 to vector<128x128xf32>
    %8 = arith.maximumf %6, %7 : vector<128x128xf32>
    %c0_6 = arith.constant 0 : index
    %c0_7 = arith.constant 0 : index
    %9 = vector.load %arg4[%c0_6, %c0_7] : memref<1x128xf32, #tpu.memory_space<vmem>>, vector<1x128xf32>
    %cst_8 = arith.constant dense<0.000000e+00> : vector<1x128xf32>
    %10 = tpu.matmul %9, %8, %cst_8 {dimension_numbers = #tpu.dot_dimension_numbers<[1], [1], [0], [0], [0, 0, 1, 0], [], []>} : vector<1x128xf32>, vector<128x128xf32>, vector<1x128xf32> -> vector<1x128xf32>
    %c0_9 = arith.constant 0 : index
    %c0_10 = arith.constant 0 : index
    %11 = memref.load %arg5[%c0_9, %c0_10] : memref<1x1xf32, #tpu.memory_space<smem>>
    %12 = vector.broadcast %11 : f32 to vector<1x128xf32>
    %13 = arith.addf %10, %12 : vector<1x128xf32>
    %cst_11 = arith.constant 0.000000e+00 : f32
    %14 = vector.broadcast %cst_11 : f32 to vector<1x128xf32>
    %15 = arith.subf %14, %13 : vector<1x128xf32>
    %16 = math.exp %15 : vector<1x128xf32>
    %cst_12 = arith.constant 1.000000e+00 : f32
    %17 = vector.broadcast %cst_12 : f32 to vector<1x128xf32>
    %18 = arith.addf %17, %16 : vector<1x128xf32>
    %19 = tpu.reciprocal %18 {approx = true} : vector<1x128xf32> -> vector<1x128xf32>
    %c0_13 = arith.constant 0 : index
    %c0_14 = arith.constant 0 : index
    %20 = vector.load %arg6[%c0_13, %c0_14] : memref<1x128xf32, #tpu.memory_space<vmem>>, vector<1x128xf32>
    tpu.vector_store %arg6[%c0_13, %c0_14], %19 {strides = array<i32>} : memref<1x128xf32, #tpu.memory_space<vmem>>, vector<1x128xf32>,
    return
  }
  func.func @transform_0(%arg0: i32) -> (i32, i32) {
    %c0_i32 = arith.constant 0 : i32
    %c0_i32_0 = arith.constant 0 : i32
    return %arg0, %c0_i32 : i32, i32
  }
  func.func @transform_1(%arg0: i32) -> (i32, i32) {
    %c0_i32 = arith.constant 0 : i32
    %c0_i32_0 = arith.constant 0 : i32
    %c0_i32_1 = arith.constant 0 : i32
    return %c0_i32, %c0_i32_0 : i32, i32
  }
  func.func @transform_2(%arg0: i32) -> (i32, i32) {
    %c0_i32 = arith.constant 0 : i32
    %c0_i32_0 = arith.constant 0 : i32
    %c0_i32_1 = arith.constant 0 : i32
    return %c0_i32, %c0_i32_0 : i32, i32
  }
  func.func @transform_3(%arg0: i32) -> (i32, i32) {
    %c0_i32 = arith.constant 0 : i32
    %c0_i32_0 = arith.constant 0 : i32
    %c0_i32_1 = arith.constant 0 : i32
    return %c0_i32, %c0_i32_0 : i32, i32
  }
  func.func @transform_4(%arg0: i32) -> (i32, i32) {
    %c0_i32 = arith.constant 0 : i32
    %c0_i32_0 = arith.constant 0 : i32
    %c0_i32_1 = arith.constant 0 : i32
    return %c0_i32, %c0_i32_0 : i32, i32
  }
  func.func @transform_5(%arg0: i32) -> (i32, i32) {
    %c0_i32 = arith.constant 0 : i32
    %c0_i32_0 = arith.constant 0 : i32
    return %c0_i32, %arg0 : i32, i32
  }
}

</mosaic_0001>

<llo_original>
// kernel: tpu_custom_call.1
$region0: #{tpu_custom_call.1}
  #allocation0 [shape = 'u32[]', space=smem, size = 0x4, offset = 0x4, fixed_abs, tag = 'smem constant byte address 0x4 - core index']
  #allocation1 [shape = 'u32[144,128]{1,0:T(1,128)}', space=vmem, size = 0x12000, scoped, tag = 'internal scratch']
  #allocation2 [shape = 'f32[1,1]{1,0:T(1,128)S(6)}', space=smem, size = 0x200, scoped, tag = 'scoped memory for tpu_custom_call.1']
  %s0 = inlined_call_operand.hbm [shape: f32[200,784], index: 0, kind: input, shape index: {}]
  %s1 = inlined_call_operand.hbm [shape: bf16[784,128], index: 1, kind: input, shape index: {}]
  %s2 = inlined_call_operand.vmem [shape: f32[1,128], index: 2, kind: input, shape index: {}]
  %s3 = inlined_call_operand.vmem [shape: f32[1,128], index: 3, kind: input, shape index: {}]
  %s4 = inlined_call_operand.<no memory space> [shape: f32[1,1], index: 4, kind: input, shape index: {}]
  %s5 = inlined_call_operand.hbm [shape: f32[1,200], index: 5, kind: output, shape index: {}]
  %s6 = sld [smem:[#allocation0]]
  $region61: #{tpu_custom_call.1} parent=0
    _
  %s8 = ssub.s32 1, %s6
  %s9 = scalar_select 0, %s8, %s6
  %10 = sst [smem:[#allocation2]] %s4
  $region1: #{tpu_custom_call.1} parent=0
    #allocation3 [shape = 'u8[917504]{0}', space=vmem, size = 0xe0000, scoped, tag = 'input window, operand 0']
    #allocation4 [shape = 's32[2]{0}', space=sflag, size = 0x8, scoped, tag = 'scoped memory for tpu_custom_call.1']
    #allocation5 [shape = 's32[2]{0}', space=sflag, size = 0x8, scoped, tag = 'scoped memory for tpu_custom_call.1']
    #allocation6 [shape = 'u8[200704]{0}', space=vmem, size = 0x31000, scoped, tag = 'input window, operand 1, single buffered']
    #allocation7 [shape = 's32[1]{0}', space=sflag, size = 0x4, scoped, tag = 'scoped memory for tpu_custom_call.1']
    #allocation8 [shape = 'u8[1024]{0}', space=vmem, size = 0x400, scoped, tag = 'output window, operand 0']
    %11 = vsyncpa [#allocation4], 0
    %s12 = scalar_lea.sflag [#allocation4], 1
    %13 = vsyncpa %s12, 0
    %14 = vsyncpa [#allocation7], 0
    %15 = vsyncpa [#allocation5], 0
    %s16 = scalar_lea.sflag [#allocation5], 1
    %17 = vsyncpa %s16, 0
    loop: start=0, step=1, limit=4
    $region2: #{tpu_custom_call.1} parent=1 // loop_pre_header
      _
    $region3: #{tpu_custom_call.1} parent=1 // loop_header
      %s19 = sphi 0, %s23
      %p20 = scmp.ge.s32.totalorder %s19, 4
      %s29 = sphi 0, %s31
      %s32 = sphi 0, %s29
      %s33 = sphi 0, %s32
      %s49 = sphi 0, %s33
      %s53 = sphi 0, %s53
      %s55 = sphi 0, %s53
      %s56 = sphi 0, %s55
      %s70 = sphi 0, %s56
      %s74 = sphi 0, %s74
      %s76 = sphi 0, %s74
      %s77 = sphi 0, %s76
      %s91 = sphi 0, %s77
      %s95 = sphi 0, %s95
      %s97 = sphi 0, %s95
      %s98 = sphi 0, %s97
      %s112 = sphi 0, %s98
      %s116 = sphi 0, %s116
      %s118 = sphi 0, %s116
      %s119 = sphi 0, %s118
      %s133 = sphi 0, %s119
      %s139 = sphi 0, %s141
      %s142 = sphi 0, %s139
      %s143 = sphi 0, %s142
      %s159 = sphi 0, %s143
    $region4: #{tpu_custom_call.1} parent=1 // loop_header_branch
      %22 = sbr.rel (%p20) target = $region8
    $region5: #{tpu_custom_call.1} parent=1 // loop_body
      %s24 = ssub.s32 %s19, 1
      %s25 = ssub.s32 %s19, 2
      %s26 = sadd.s32 %s19, 1
      %s27 = ssub.s32 %s19, %s26
      %p28 = scmp.eq.s32.totalorder %s27, 0
      %s30 = sadd.s32 %s29, 1
      %s31 = scalar_select %p28, %s29, %s30
      %p34 = pneg %p28
      %p35 = scmp.eq.s32.totalorder %s19, 1
      %p36 = por %p34, %p35
      %p37 = scmp.ne.s32.totalorder %s29, %s32
      %p38 = scmp.eq.s32.totalorder %s19, 0
      %p39 = por %p37, %p38
      %p40 = scmp.ne.s32.totalorder %s29, %s32
      %p41 = scmp.eq.s32.totalorder %s24, 1
      %p42 = por %p40, %p41
      %p43 = scmp.ne.s32.totalorder %s32, %s33
      %p44 = scmp.eq.s32.totalorder %s24, 0
      %p45 = por %p43, %p44
      %p46 = scmp.ne.s32.totalorder %s32, %s33
      %p47 = scmp.eq.s32.totalorder %s25, 1
      %p48 = por %p46, %p47
      %p50 = scmp.ne.s32.totalorder %s33, %s49
      %p51 = scmp.eq.s32.totalorder %s25, 0
      %p52 = por %p50, %p51
      %s54 = sadd.s32 %s53, 1
      %p57 = scmp.eq.s32.totalorder %s19, 1
      %p58 = scmp.ne.s32.totalorder %s53, %s55
      %p59 = scmp.eq.s32.totalorder %s19, 0
      %p60 = por %p58, %p59
      %p61 = scmp.ne.s32.totalorder %s53, %s55
      %p62 = scmp.eq.s32.totalorder %s24, 1
      %p63 = por %p61, %p62
      %p64 = scmp.ne.s32.totalorder %s55, %s56
      %p65 = scmp.eq.s32.totalorder %s24, 0
      %p66 = por %p64, %p65
      %p67 = scmp.ne.s32.totalorder %s55, %s56
      %p68 = scmp.eq.s32.totalorder %s25, 1
      %p69 = por %p67, %p68
      %p71 = scmp.ne.s32.totalorder %s56, %s70
      %p72 = scmp.eq.s32.totalorder %s25, 0
      %p73 = por %p71, %p72
      %s75 = sadd.s32 %s74, 1
      %p78 = scmp.eq.s32.totalorder %s19, 1
      %p79 = scmp.ne.s32.totalorder %s74, %s76
      %p80 = scmp.eq.s32.totalorder %s19, 0
      %p81 = por %p79, %p80
      %p82 = scmp.ne.s32.totalorder %s74, %s76
      %p83 = scmp.eq.s32.totalorder %s24, 1
      %p84 = por %p82, %p83
      %p85 = scmp.ne.s32.totalorder %s76, %s77
      %p86 = scmp.eq.s32.totalorder %s24, 0
      %p87 = por %p85, %p86
      %p88 = scmp.ne.s32.totalorder %s76, %s77
      %p89 = scmp.eq.s32.totalorder %s25, 1
      %p90 = por %p88, %p89
      %p92 = scmp.ne.s32.totalorder %s77, %s91
      %p93 = scmp.eq.s32.totalorder %s25, 0
      %p94 = por %p92, %p93
      %s96 = sadd.s32 %s95, 1
      %p99 = scmp.eq.s32.totalorder %s19, 1
      %p100 = scmp.ne.s32.totalorder %s95, %s97
      %p101 = scmp.eq.s32.totalorder %s19, 0
      %p102 = por %p100, %p101
      %p103 = scmp.ne.s32.totalorder %s95, %s97
      %p104 = scmp.eq.s32.totalorder %s24, 1
      %p105 = por %p103, %p104
      %p106 = scmp.ne.s32.totalorder %s97, %s98
      %p107 = scmp.eq.s32.totalorder %s24, 0
      %p108 = por %p106, %p107
      %p109 = scmp.ne.s32.totalorder %s97, %s98
      %p110 = scmp.eq.s32.totalorder %s25, 1
      %p111 = por %p109, %p110
      %p113 = scmp.ne.s32.totalorder %s98, %s112
      %p114 = scmp.eq.s32.totalorder %s25, 0
      %p115 = por %p113, %p114
      %s117 = sadd.s32 %s116, 1
      %p120 = scmp.eq.s32.totalorder %s19, 1
      %p121 = scmp.ne.s32.totalorder %s116, %s118
      %p122 = scmp.eq.s32.totalorder %s19, 0
      %p123 = por %p121, %p122
      %p124 = scmp.ne.s32.totalorder %s116, %s118
      %p125 = scmp.eq.s32.totalorder %s24, 1
      %p126 = por %p124, %p125
      %p127 = scmp.ne.s32.totalorder %s118, %s119
      %p128 = scmp.eq.s32.totalorder %s24, 0
      %p129 = por %p127, %p128
      %p130 = scmp.ne.s32.totalorder %s118, %s119
      %p131 = scmp.eq.s32.totalorder %s25, 1
      %p132 = por %p130, %p131
      %p134 = scmp.ne.s32.totalorder %s119, %s133
      %p135 = scmp.eq.s32.totalorder %s25, 0
      %p136 = por %p134, %p135
      %s137 = ssub.s32 %s19, %s26
      %p138 = scmp.eq.s32.totalorder %s137, 0
      %s140 = sadd.s32 %s139, 1
      %s141 = scalar_select %p138, %s139, %s140
      %p144 = pneg %p138
      %p145 = scmp.eq.s32.totalorder %s19, 1
      %p146 = por %p144, %p145
      %p147 = scmp.ne.s32.totalorder %s139, %s142
      %p148 = scmp.eq.s32.totalorder %s19, 0
      %p149 = por %p147, %p148
      %p150 = scmp.ne.s32.totalorder %s139, %s142
      %p151 = scmp.eq.s32.totalorder %s24, 1
      %p152 = por %p150, %p151
      %p153 = scmp.ne.s32.totalorder %s142, %s143
      %p154 = scmp.eq.s32.totalorder %s24, 0
      %p155 = por %p153, %p154
      %p156 = scmp.ne.s32.totalorder %s142, %s143
      %p157 = scmp.eq.s32.totalorder %s25, 1
      %p158 = por %p156, %p157
      %p160 = scmp.ne.s32.totalorder %s143, %s159
      %p161 = scmp.eq.s32.totalorder %s25, 0
      %p162 = por %p160, %p161
      %p163 = scmp.le.s32.totalorder 1, %s19
      %p164 = scmp.lt.s32.totalorder %s19, 3
      %p165 = pnand %p163, %p164
      %p166 = pneg %p165
      // Predicated region
      $region9: #{tpu_custom_call.1} parent=5 // pred_check
        _
      $region10: #{tpu_custom_call.1} parent=5 // pred_check_branch
        %168 = sbr.rel (%p165) target = $region12
      $region11: #{tpu_custom_call.1} parent=5 // pred_region
        %s169 = ssub.s32 %s19, 1
        // Predicated region
        $region13: #{tpu_custom_call.1} parent=11 // pred_check
          %p170 = pneg %p66
        $region14: #{tpu_custom_call.1} parent=11 // pred_check_branch
          %172 = sbr.rel (%p170) target = $region16
        $region15: #{tpu_custom_call.1} parent=11 // pred_region
          %s174 = ssub.s32 6272, 6272
          %175 = vsyncadd [#allocation7], %s174
          %s176 = sshll.u32 [#allocation6], 4
          %s177 = int_to_ptr.vmem [resolvable:$true] %s176
          %182 = dma.hbm_to_vmem [thread:$0]  %s1, 6272, %s177, [#allocation7], 64, 64, 4
        $region16: #{tpu_custom_call.1} parent=11 // pred_fallthru
          _
        // Predicated region
        $region17: #{tpu_custom_call.1} parent=11 // pred_check
          %p183 = pneg %p87
        $region18: #{tpu_custom_call.1} parent=11 // pred_check_branch
          %185 = sbr.rel (%p183) target = $region20
        $region19: #{tpu_custom_call.1} parent=11 // pred_region
          _
        $region20: #{tpu_custom_call.1} parent=11 // pred_fallthru
          _
        // Predicated region
        $region21: #{tpu_custom_call.1} parent=11 // pred_check
          %p186 = pneg %p108
        $region22: #{tpu_custom_call.1} parent=11 // pred_check_branch
          %188 = sbr.rel (%p186) target = $region24
        $region23: #{tpu_custom_call.1} parent=11 // pred_region
          _
        $region24: #{tpu_custom_call.1} parent=11 // pred_fallthru
          _
        // Predicated region
        $region25: #{tpu_custom_call.1} parent=11 // pred_check
          %p189 = pneg %p129
        $region26: #{tpu_custom_call.1} parent=11 // pred_check_branch
          %191 = sbr.rel (%p189) target = $region28
        $region27: #{tpu_custom_call.1} parent=11 // pred_region
          _
        $region28: #{tpu_custom_call.1} parent=11 // pred_fallthru
          _
      $region12: #{tpu_custom_call.1} parent=5 // pred_fallthru
        _
      %p192 = scmp.lt.s32.totalorder %s19, 2
      // Predicated region
      $region29: #{tpu_custom_call.1} parent=5 // pred_check
        %p193 = pneg %p192
      $region30: #{tpu_custom_call.1} parent=5 // pred_check_branch
        %195 = sbr.rel (%p193) target = $region32
      $region31: #{tpu_custom_call.1} parent=5 // pred_region
        // Predicated region
        $region33: #{tpu_custom_call.1} parent=31 // pred_check
          %p196 = pneg %p39
        $region34: #{tpu_custom_call.1} parent=31 // pred_check_branch
          %198 = sbr.rel (%p196) target = $region36
        $region35: #{tpu_custom_call.1} parent=31 // pred_region
          %s199 = sand.u32 %s29, 1
          %s200 = scalar_lea.sflag [#allocation4], %s199
          %s201 = sand.u32 %s29, 1
          %s202 = smul.addr %s201, 896
          %s203 = scalar_lea.vmem [#allocation3], %s202
          %s204 = smul.u32 16, %s19
          %s205 = ssub.s32 25, %s204
          %p206 = scmp.lt.s32.totalorder %s205, 16
          %s207 = scalar_select %p206, %s205, 16
          %s208 = smul.u32 128, %s207
          %s209 = smul.u32 %s208, 7
          %s211 = ssub.s32 14336, %s209
          %212 = vsyncadd %s200, %s211
          %p213 = scmp.ne.s32.totalorder 0, %s209
          %s214 = smul.addr %s204, 7
          %s215 = smul.addr %s214, 128
          %s216 = scalar_lea.hbm %s0, %s215
          %s217 = smul.u32 56, %s207
          %s218 = sshll.u32 %s203, 4
          %s219 = int_to_ptr.vmem [resolvable:$true] %s218
          %s220 = sshll.u32 %s217, 4
          %224 = dma.hbm_to_vmem [thread:$0]  (%p213), %s216, %s220, %s219, %s200, 896, 896, 56
        $region36: #{tpu_custom_call.1} parent=31 // pred_fallthru
          _
      $region32: #{tpu_custom_call.1} parent=5 // pred_fallthru
        _
      %p225 = scmp.le.s32.totalorder 1, %s19
      %p226 = scmp.lt.s32.totalorder %s19, 3
      %p227 = pnand %p225, %p226
      %p228 = pneg %p227
      // Predicated region
      $region37: #{tpu_custom_call.1} parent=5 // pred_check
        _
      $region38: #{tpu_custom_call.1} parent=5 // pred_check_branch
        %230 = sbr.rel (%p227) target = $region40
      $region39: #{tpu_custom_call.1} parent=5 // pred_region
        %s231 = ssub.s32 %s19, 1
        %s232 = sand.u32 %s32, 1
        %s233 = scalar_lea.sflag [#allocation4], %s232
        %s234 = sand.u32 %s32, 1
        %s235 = smul.addr %s234, 896
        %s236 = scalar_lea.vmem [#allocation3], %s235
        // Predicated region
        $region41: #{tpu_custom_call.1} parent=39 // pred_check
          %p237 = pneg %p45
        $region42: #{tpu_custom_call.1} parent=39 // pred_check_branch
          %239 = sbr.rel (%p237) target = $region44
        $region43: #{tpu_custom_call.1} parent=39 // pred_region
          %240 = dma.done %s233, 14336
        $region44: #{tpu_custom_call.1} parent=39 // pred_fallthru
          _
        // Predicated region
        $region45: #{tpu_custom_call.1} parent=39 // pred_check
          %p241 = pneg %p66
        $region46: #{tpu_custom_call.1} parent=39 // pred_check_branch
          %243 = sbr.rel (%p241) target = $region48
        $region47: #{tpu_custom_call.1} parent=39 // pred_region
          %244 = dma.done [#allocation7], 6272
        $region48: #{tpu_custom_call.1} parent=39 // pred_fallthru
          _
        %s245 = sand.u32 %s32, 1
        %s246 = scalar_lea.sflag [#allocation4], %s245
        %s247 = sand.u32 %s32, 1
        %s248 = smul.addr %s247, 896
        %s249 = scalar_lea.vmem [#allocation3], %s248
        %p250 = pneg %p45
        %p251 = pneg %p42
        %p252 = pneg %p66
        %p253 = pneg %p63
        %p254 = pneg %p87
        %p255 = pneg %p84
        %p256 = pneg %p108
        %p257 = pneg %p105
        %p258 = pneg %p129
        %p259 = pneg %p126
        %p260 = pneg %p155
        %p261 = pneg %p152
        %s262 = sand.u32 %s142, 1
        %s263 = scalar_lea.sflag [#allocation5], %s262
        %s264 = sand.u32 %s142, 1
        %s265 = scalar_lea.vmem [#allocation8], %s264
        %s266 = smul.u32 16, %s24
        %s267 = ssub.s32 25, %s266
        %p268 = scmp.lt.s32.totalorder %s267, 16
        %s269 = scalar_select %p268, %s267, 16
        %s270 = smul.u32 128, %s269
        %s271 = smul.u32 %s270, 7
        %v273 = vld [vmem:[%s236] sm:$0xff]
        %v274 = vld [vmem:[%s236 + $0x8] sm:$0xff]
        %v275 = vld [vmem:[%s236 + $0x10] sm:$0xff]
        %v276 = vld [vmem:[%s236 + $0x18] sm:$0xff]
        %v277 = vld [vmem:[%s236 + $0x20] sm:$0xff]
        %v278 = vld [vmem:[%s236 + $0x28] sm:$0xff]
        %v279 = vld [vmem:[%s236 + $0x30] sm:$0xff]
        %v280 = vld [vmem:[%s236 + $0x38] sm:$0xff]
        %v281 = vld [vmem:[%s236 + $0x40] sm:$0xff]
        %v282 = vld [vmem:[%s236 + $0x48] sm:$0xff]
        %v283 = vld [vmem:[%s236 + $0x50] sm:$0xff]
        %v284 = vld [vmem:[%s236 + $0x58] sm:$0xff]
        %v285 = vld [vmem:[%s236 + $0x60] sm:$0xff]
        %v286 = vld [vmem:[%s236 + $0x68] sm:$0xff]
        %v287 = vld [vmem:[%s236 + $0x70] sm:$0xff]
        %v288 = vld [vmem:[%s236 + $0x78] sm:$0xff]
        %v289 = vld [vmem:[%s236 + $0x80] sm:$0xff]
        %v290 = vld [vmem:[%s236 + $0x88] sm:$0xff]
        %v291 = vld [vmem:[%s236 + $0x90] sm:$0xff]
        %v292 = vld [vmem:[%s236 + $0x98] sm:$0xff]
        %v293 = vld [vmem:[%s236 + $0xa0] sm:$0xff]
        %v294 = vld [vmem:[%s236 + $0xa8] sm:$0xff]
        %v295 = vld [vmem:[%s236 + $0xb0] sm:$0xff]
        %v296 = vld [vmem:[%s236 + $0xb8] sm:$0xff]
        %v297 = vld [vmem:[%s236 + $0xc0] sm:$0xff]
        %v298 = vld [vmem:[%s236 + $0xc8] sm:$0xff]
        %v299 = vld [vmem:[%s236 + $0xd0] sm:$0xff]
        %v300 = vld [vmem:[%s236 + $0xd8] sm:$0xff]
        %v301 = vld [vmem:[%s236 + $0xe0] sm:$0xff]
        %v302 = vld [vmem:[%s236 + $0xe8] sm:$0xff]
        %v303 = vld [vmem:[%s236 + $0xf0] sm:$0xff]
        %v304 = vld [vmem:[%s236 + $0xf8] sm:$0xff]
        %v305 = vld [vmem:[%s236 + $0x100] sm:$0xff]
        %v306 = vld [vmem:[%s236 + $0x108] sm:$0xff]
        %v307 = vld [vmem:[%s236 + $0x110] sm:$0xff]
        %v308 = vld [vmem:[%s236 + $0x118] sm:$0xff]
        %v309 = vld [vmem:[%s236 + $0x120] sm:$0xff]
        %v310 = vld [vmem:[%s236 + $0x128] sm:$0xff]
        %v311 = vld [vmem:[%s236 + $0x130] sm:$0xff]
        %v312 = vld [vmem:[%s236 + $0x138] sm:$0xff]
        %v313 = vld [vmem:[%s236 + $0x140] sm:$0xff]
        %v314 = vld [vmem:[%s236 + $0x148] sm:$0xff]
        %v315 = vld [vmem:[%s236 + $0x150] sm:$0xff]
        %v316 = vld [vmem:[%s236 + $0x158] sm:$0xff]
        %v317 = vld [vmem:[%s236 + $0x160] sm:$0xff]
        %v318 = vld [vmem:[%s236 + $0x168] sm:$0xff]
        %v319 = vld [vmem:[%s236 + $0x170] sm:$0xff]
        %v320 = vld [vmem:[%s236 + $0x178] sm:$0xff]
        %v321 = vld [vmem:[%s236 + $0x180] sm:$0xff]
        %v322 = vld [vmem:[%s236 + $0x188] sm:$0xff]
        %v323 = vld [vmem:[%s236 + $0x190] sm:$0xff]
        %v324 = vld [vmem:[%s236 + $0x198] sm:$0xff]
        %v325 = vld [vmem:[%s236 + $0x1a0] sm:$0xff]
        %v326 = vld [vmem:[%s236 + $0x1a8] sm:$0xff]
        %v327 = vld [vmem:[%s236 + $0x1b0] sm:$0xff]
        %v328 = vld [vmem:[%s236 + $0x1b8] sm:$0xff]
        %v329 = vld [vmem:[%s236 + $0x1c0] sm:$0xff]
        %v330 = vld [vmem:[%s236 + $0x1c8] sm:$0xff]
        %v331 = vld [vmem:[%s236 + $0x1d0] sm:$0xff]
        %v332 = vld [vmem:[%s236 + $0x1d8] sm:$0xff]
        %v333 = vld [vmem:[%s236 + $0x1e0] sm:$0xff]
        %v334 = vld [vmem:[%s236 + $0x1e8] sm:$0xff]
        %v335 = vld [vmem:[%s236 + $0x1f0] sm:$0xff]
        %v336 = vld [vmem:[%s236 + $0x1f8] sm:$0xff]
        %v337 = vld [vmem:[%s236 + $0x200] sm:$0xff]
        %v338 = vld [vmem:[%s236 + $0x208] sm:$0xff]
        %v339 = vld [vmem:[%s236 + $0x210] sm:$0xff]
        %v340 = vld [vmem:[%s236 + $0x218] sm:$0xff]
        %v341 = vld [vmem:[%s236 + $0x220] sm:$0xff]
        %v342 = vld [vmem:[%s236 + $0x228] sm:$0xff]
        %v343 = vld [vmem:[%s236 + $0x230] sm:$0xff]
        %v344 = vld [vmem:[%s236 + $0x238] sm:$0xff]
        %v345 = vld [vmem:[%s236 + $0x240] sm:$0xff]
        %v346 = vld [vmem:[%s236 + $0x248] sm:$0xff]
        %v347 = vld [vmem:[%s236 + $0x250] sm:$0xff]
        %v348 = vld [vmem:[%s236 + $0x258] sm:$0xff]
        %v349 = vld [vmem:[%s236 + $0x260] sm:$0xff]
        %v350 = vld [vmem:[%s236 + $0x268] sm:$0xff]
        %v351 = vld [vmem:[%s236 + $0x270] sm:$0xff]
        %v352 = vld [vmem:[%s236 + $0x278] sm:$0xff]
        %v353 = vld [vmem:[%s236 + $0x280] sm:$0xff]
        %v354 = vld [vmem:[%s236 + $0x288] sm:$0xff]
        %v355 = vld [vmem:[%s236 + $0x290] sm:$0xff]
        %v356 = vld [vmem:[%s236 + $0x298] sm:$0xff]
        %v357 = vld [vmem:[%s236 + $0x2a0] sm:$0xff]
        %v358 = vld [vmem:[%s236 + $0x2a8] sm:$0xff]
        %v359 = vld [vmem:[%s236 + $0x2b0] sm:$0xff]
        %v360 = vld [vmem:[%s236 + $0x2b8] sm:$0xff]
        %v361 = vld [vmem:[%s236 + $0x2c0] sm:$0xff]
        %v362 = vld [vmem:[%s236 + $0x2c8] sm:$0xff]
        %v363 = vld [vmem:[%s236 + $0x2d0] sm:$0xff]
        %v364 = vld [vmem:[%s236 + $0x2d8] sm:$0xff]
        %v365 = vld [vmem:[%s236 + $0x2e0] sm:$0xff]
        %v366 = vld [vmem:[%s236 + $0x2e8] sm:$0xff]
        %v367 = vld [vmem:[%s236 + $0x2f0] sm:$0xff]
        %v368 = vld [vmem:[%s236 + $0x2f8] sm:$0xff]
        %v369 = vld [vmem:[%s236 + $0x300] sm:$0xff]
        %v370 = vld [vmem:[%s236 + $0x308] sm:$0xff]
        %v371 = vld [vmem:[%s236 + $0x310] sm:$0xff]
        %v372 = vld [vmem:[%s236 + $0x318] sm:$0xff]
        %v373 = vld [vmem:[%s236 + $0x320] sm:$0xff]
        %v374 = vld [vmem:[%s236 + $0x328] sm:$0xff]
        %v375 = vld [vmem:[%s236 + $0x330] sm:$0xff]
        %v376 = vld [vmem:[%s236 + $0x338] sm:$0xff]
        %v377 = vld [vmem:[%s236 + $0x340] sm:$0xff]
        %v378 = vld [vmem:[%s236 + $0x348] sm:$0xff]
        %v379 = vld [vmem:[%s236 + $0x350] sm:$0xff]
        %v380 = vld [vmem:[%s236 + $0x358] sm:$0xff]
        %v381 = vld [vmem:[%s236 + $0x360] sm:$0xff]
        %v382 = vld [vmem:[%s236 + $0x368] sm:$0xff]
        %v383 = vld [vmem:[%s236 + $0x370] sm:$0xff]
        %v384 = vld [vmem:[%s236 + $0x378] sm:$0xff]
        %v385 = vpack.c.bf16 %v280, %v273
        %v386 = vpack.c.bf16 %v281, %v274
        %v387 = vpack.c.bf16 %v282, %v275
        %v388 = vpack.c.bf16 %v283, %v276
        %v389 = vpack.c.bf16 %v284, %v277
        %v390 = vpack.c.bf16 %v285, %v278
        %v391 = vpack.c.bf16 %v286, %v279
        %v392 = vpack.c.bf16 %v294, %v287
        %v393 = vpack.c.bf16 %v295, %v288
        %v394 = vpack.c.bf16 %v296, %v289
        %v395 = vpack.c.bf16 %v297, %v290
        %v396 = vpack.c.bf16 %v298, %v291
        %v397 = vpack.c.bf16 %v299, %v292
        %v398 = vpack.c.bf16 %v300, %v293
        %v399 = vpack.c.bf16 %v308, %v301
        %v400 = vpack.c.bf16 %v309, %v302
        %v401 = vpack.c.bf16 %v310, %v303
        %v402 = vpack.c.bf16 %v311, %v304
        %v403 = vpack.c.bf16 %v312, %v305
        %v404 = vpack.c.bf16 %v313, %v306
        %v405 = vpack.c.bf16 %v314, %v307
        %v406 = vpack.c.bf16 %v322, %v315
        %v407 = vpack.c.bf16 %v323, %v316
        %v408 = vpack.c.bf16 %v324, %v317
        %v409 = vpack.c.bf16 %v325, %v318
        %v410 = vpack.c.bf16 %v326, %v319
        %v411 = vpack.c.bf16 %v327, %v320
        %v412 = vpack.c.bf16 %v328, %v321
        %v413 = vpack.c.bf16 %v336, %v329
        %v414 = vpack.c.bf16 %v337, %v330
        %v415 = vpack.c.bf16 %v338, %v331
        %v416 = vpack.c.bf16 %v339, %v332
        %v417 = vpack.c.bf16 %v340, %v333
        %v418 = vpack.c.bf16 %v341, %v334
        %v419 = vpack.c.bf16 %v342, %v335
        %v420 = vpack.c.bf16 %v350, %v343
        %v421 = vpack.c.bf16 %v351, %v344
        %v422 = vpack.c.bf16 %v352, %v345
        %v423 = vpack.c.bf16 %v353, %v346
        %v424 = vpack.c.bf16 %v354, %v347
        %v425 = vpack.c.bf16 %v355, %v348
        %v426 = vpack.c.bf16 %v356, %v349
        %v427 = vpack.c.bf16 %v364, %v357
        %v428 = vpack.c.bf16 %v365, %v358
        %v429 = vpack.c.bf16 %v366, %v359
        %v430 = vpack.c.bf16 %v367, %v360
        %v431 = vpack.c.bf16 %v368, %v361
        %v432 = vpack.c.bf16 %v369, %v362
        %v433 = vpack.c.bf16 %v370, %v363
        %v434 = vpack.c.bf16 %v378, %v371
        %v435 = vpack.c.bf16 %v379, %v372
        %v436 = vpack.c.bf16 %v380, %v373
        %v437 = vpack.c.bf16 %v381, %v374
        %v438 = vpack.c.bf16 %v382, %v375
        %v439 = vpack.c.bf16 %v383, %v376
        %v440 = vpack.c.bf16 %v384, %v377
        %v441 = vld [vmem:[#allocation6] sm:$0xf]
        %v442 = vld [vmem:[#allocation6 + $0x4] sm:$0xf]
        %v443 = vld [vmem:[#allocation6 + $0x8] sm:$0xf]
        %v444 = vld [vmem:[#allocation6 + $0xc] sm:$0xf]
        %v445 = vld [vmem:[#allocation6 + $0x10] sm:$0xf]
        %v446 = vld [vmem:[#allocation6 + $0x14] sm:$0xf]
        %v447 = vld [vmem:[#allocation6 + $0x18] sm:$0xf]
        %v448 = vld [vmem:[#allocation6 + $0x1c] sm:$0xf]
        %v449 = vld [vmem:[#allocation6 + $0x20] sm:$0xf]
        %v450 = vld [vmem:[#allocation6 + $0x24] sm:$0xf]
        %v451 = vld [vmem:[#allocation6 + $0x28] sm:$0xf]
        %v452 = vld [vmem:[#allocation6 + $0x2c] sm:$0xf]
        %v453 = vld [vmem:[#allocation6 + $0x30] sm:$0xf]
        %v454 = vld [vmem:[#allocation6 + $0x34] sm:$0xf]
        %v455 = vld [vmem:[#allocation6 + $0x38] sm:$0xf]
        %v456 = vld [vmem:[#allocation6 + $0x3c] sm:$0xf]
        %v457 = vld [vmem:[#allocation6 + $0x40] sm:$0xf]
        %v458 = vld [vmem:[#allocation6 + $0x44] sm:$0xf]
        %v459 = vld [vmem:[#allocation6 + $0x48] sm:$0xf]
        %v460 = vld [vmem:[#allocation6 + $0x4c] sm:$0xf]
        %v461 = vld [vmem:[#allocation6 + $0x50] sm:$0xf]
        %v462 = vld [vmem:[#allocation6 + $0x54] sm:$0xf]
        %v463 = vld [vmem:[#allocation6 + $0x58] sm:$0xf]
        %v464 = vld [vmem:[#allocation6 + $0x5c] sm:$0xf]
        %v465 = vld [vmem:[#allocation6 + $0x60] sm:$0xf]
        %v466 = vld [vmem:[#allocation6 + $0x64] sm:$0xf]
        %v467 = vld [vmem:[#allocation6 + $0x68] sm:$0xf]
        %v468 = vld [vmem:[#allocation6 + $0x6c] sm:$0xf]
        %v469 = vld [vmem:[#allocation6 + $0x70] sm:$0xf]
        %v470 = vld [vmem:[#allocation6 + $0x74] sm:$0xf]
        %v471 = vld [vmem:[#allocation6 + $0x78] sm:$0xf]
        %v472 = vld [vmem:[#allocation6 + $0x7c] sm:$0xf]
        %v473 = vld [vmem:[#allocation6 + $0x80] sm:$0xf]
        %v474 = vld [vmem:[#allocation6 + $0x84] sm:$0xf]
        %v475 = vld [vmem:[#allocation6 + $0x88] sm:$0xf]
        %v476 = vld [vmem:[#allocation6 + $0x8c] sm:$0xf]
        %v477 = vld [vmem:[#allocation6 + $0x90] sm:$0xf]
        %v478 = vld [vmem:[#allocation6 + $0x94] sm:$0xf]
        %v479 = vld [vmem:[#allocation6 + $0x98] sm:$0xf]
        %v480 = vld [vmem:[#allocation6 + $0x9c] sm:$0xf]
        %v481 = vld [vmem:[#allocation6 + $0xa0] sm:$0xf]
        %v482 = vld [vmem:[#allocation6 + $0xa4] sm:$0xf]
        %v483 = vld [vmem:[#allocation6 + $0xa8] sm:$0xf]
        %v484 = vld [vmem:[#allocation6 + $0xac] sm:$0xf]
        %v485 = vld [vmem:[#allocation6 + $0xb0] sm:$0xf]
        %v486 = vld [vmem:[#allocation6 + $0xb4] sm:$0xf]
        %v487 = vld [vmem:[#allocation6 + $0xb8] sm:$0xf]
        %v488 = vld [vmem:[#allocation6 + $0xbc] sm:$0xf]
        %v489 = vld [vmem:[#allocation6 + $0xc0] sm:$0xf]
        %v490 = vld [vmem:[#allocation6 + $0xc4] sm:$0xf]
        %v491 = vld [vmem:[#allocation6 + $0xc8] sm:$0xf]
        %v492 = vld [vmem:[#allocation6 + $0xcc] sm:$0xf]
        %v493 = vld [vmem:[#allocation6 + $0xd0] sm:$0xf]
        %v494 = vld [vmem:[#allocation6 + $0xd4] sm:$0xf]
        %v495 = vld [vmem:[#allocation6 + $0xd8] sm:$0xf]
        %v496 = vld [vmem:[#allocation6 + $0xdc] sm:$0xf]
        %v497 = vld [vmem:[#allocation6 + $0xe0] sm:$0xf]
        %v498 = vld [vmem:[#allocation6 + $0xe4] sm:$0xf]
        %v499 = vld [vmem:[#allocation6 + $0xe8] sm:$0xf]
        %v500 = vld [vmem:[#allocation6 + $0xec] sm:$0xf]
        %v501 = vld [vmem:[#allocation6 + $0xf0] sm:$0xf]
        %v502 = vld [vmem:[#allocation6 + $0xf4] sm:$0xf]
        %v503 = vld [vmem:[#allocation6 + $0xf8] sm:$0xf]
        %v504 = vld [vmem:[#allocation6 + $0xfc] sm:$0xf]
        %v505 = vld [vmem:[#allocation6 + $0x100] sm:$0xf]
        %v506 = vld [vmem:[#allocation6 + $0x104] sm:$0xf]
        %v507 = vld [vmem:[#allocation6 + $0x108] sm:$0xf]
        %v508 = vld [vmem:[#allocation6 + $0x10c] sm:$0xf]
        %v509 = vld [vmem:[#allocation6 + $0x110] sm:$0xf]
        %v510 = vld [vmem:[#allocation6 + $0x114] sm:$0xf]
        %v511 = vld [vmem:[#allocation6 + $0x118] sm:$0xf]
        %v512 = vld [vmem:[#allocation6 + $0x11c] sm:$0xf]
        %v513 = vld [vmem:[#allocation6 + $0x120] sm:$0xf]
        %v514 = vld [vmem:[#allocation6 + $0x124] sm:$0xf]
        %v515 = vld [vmem:[#allocation6 + $0x128] sm:$0xf]
        %v516 = vld [vmem:[#allocation6 + $0x12c] sm:$0xf]
        %v517 = vld [vmem:[#allocation6 + $0x130] sm:$0xf]
        %v518 = vld [vmem:[#allocation6 + $0x134] sm:$0xf]
        %v519 = vld [vmem:[#allocation6 + $0x138] sm:$0xf]
        %v520 = vld [vmem:[#allocation6 + $0x13c] sm:$0xf]
        %v521 = vld [vmem:[#allocation6 + $0x140] sm:$0xf]
        %v522 = vld [vmem:[#allocation6 + $0x144] sm:$0xf]
        %v523 = vld [vmem:[#allocation6 + $0x148] sm:$0xf]
        %v524 = vld [vmem:[#allocation6 + $0x14c] sm:$0xf]
        %v525 = vld [vmem:[#allocation6 + $0x150] sm:$0xf]
        %v526 = vld [vmem:[#allocation6 + $0x154] sm:$0xf]
        %v527 = vld [vmem:[#allocation6 + $0x158] sm:$0xf]
        %v528 = vld [vmem:[#allocation6 + $0x15c] sm:$0xf]
        %v529 = vld [vmem:[#allocation6 + $0x160] sm:$0xf]
        %v530 = vld [vmem:[#allocation6 + $0x164] sm:$0xf]
        %v531 = vld [vmem:[#allocation6 + $0x168] sm:$0xf]
        %v532 = vld [vmem:[#allocation6 + $0x16c] sm:$0xf]
        %v533 = vld [vmem:[#allocation6 + $0x170] sm:$0xf]
        %v534 = vld [vmem:[#allocation6 + $0x174] sm:$0xf]
        %v535 = vld [vmem:[#allocation6 + $0x178] sm:$0xf]
        %v536 = vld [vmem:[#allocation6 + $0x17c] sm:$0xf]
        %v537 = vld [vmem:[#allocation6 + $0x180] sm:$0xf]
        %v538 = vld [vmem:[#allocation6 + $0x184] sm:$0xf]
        %v539 = vld [vmem:[%s2] sm:$0x1]
        %v541 = vlaneseq
        %v542 = vshrl.u32 %v541, 7
        %v543 = vsub.s32 0, %v542
        %v544 = vrot.slane %v539, %v543
        %v644 = vunpack.c.l.b16 %v441
        %v645 = vunpack.c.l.b16 %v442
        %v646 = vunpack.c.l.b16 %v443
        %v647 = vunpack.c.l.b16 %v444
        %v648 = vunpack.c.l.b16 %v445
        %v649 = vunpack.c.l.b16 %v446
        %v650 = vunpack.c.l.b16 %v447
        %v651 = vunpack.c.l.b16 %v448
        %v652 = vunpack.c.l.b16 %v449
        %v653 = vunpack.c.l.b16 %v450
        %v654 = vunpack.c.l.b16 %v451
        %v655 = vunpack.c.l.b16 %v452
        %v656 = vunpack.c.l.b16 %v453
        %v657 = vunpack.c.l.b16 %v454
        %v658 = vunpack.c.l.b16 %v455
        %v659 = vunpack.c.l.b16 %v456
        %v660 = vunpack.c.l.b16 %v457
        %v661 = vunpack.c.l.b16 %v458
        %v662 = vunpack.c.l.b16 %v459
        %v663 = vunpack.c.l.b16 %v460
        %v664 = vunpack.c.l.b16 %v461
        %v665 = vunpack.c.l.b16 %v462
        %v666 = vunpack.c.l.b16 %v463
        %v667 = vunpack.c.l.b16 %v464
        %v668 = vunpack.c.l.b16 %v465
        %v669 = vunpack.c.l.b16 %v466
        %v670 = vunpack.c.l.b16 %v467
        %v671 = vunpack.c.l.b16 %v468
        %v672 = vunpack.c.l.b16 %v469
        %v673 = vunpack.c.l.b16 %v470
        %v674 = vunpack.c.l.b16 %v471
        %v675 = vunpack.c.l.b16 %v472
        %v676 = vunpack.c.l.b16 %v473
        %v677 = vunpack.c.l.b16 %v474
        %v678 = vunpack.c.l.b16 %v475
        %v679 = vunpack.c.l.b16 %v476
        %v680 = vunpack.c.l.b16 %v477
        %v681 = vunpack.c.l.b16 %v478
        %v682 = vunpack.c.l.b16 %v479
        %v683 = vunpack.c.l.b16 %v480
        %v684 = vunpack.c.l.b16 %v481
        %v685 = vunpack.c.l.b16 %v482
        %v686 = vunpack.c.l.b16 %v483
        %v687 = vunpack.c.l.b16 %v484
        %v688 = vunpack.c.l.b16 %v485
        %v689 = vunpack.c.l.b16 %v486
        %v690 = vunpack.c.l.b16 %v487
        %v691 = vunpack.c.l.b16 %v488
        %v692 = vunpack.c.l.b16 %v489
        %v693 = vunpack.c.l.b16 %v490
        %v694 = vunpack.c.l.b16 %v491
        %v695 = vunpack.c.l.b16 %v492
        %v696 = vunpack.c.l.b16 %v493
        %v697 = vunpack.c.l.b16 %v494
        %v698 = vunpack.c.l.b16 %v495
        %v699 = vunpack.c.l.b16 %v496
        %v700 = vunpack.c.l.b16 %v497
        %v701 = vunpack.c.l.b16 %v498
        %v702 = vunpack.c.l.b16 %v499
        %v703 = vunpack.c.l.b16 %v500
        %v704 = vunpack.c.l.b16 %v501
        %v705 = vunpack.c.l.b16 %v502
        %v706 = vunpack.c.l.b16 %v503
        %v707 = vunpack.c.l.b16 %v504
        %v708 = vunpack.c.l.b16 %v505
        %v709 = vunpack.c.l.b16 %v506
        %v710 = vunpack.c.l.b16 %v507
        %v711 = vunpack.c.l.b16 %v508
        %v712 = vunpack.c.l.b16 %v509
        %v713 = vunpack.c.l.b16 %v510
        %v714 = vunpack.c.l.b16 %v511
        %v715 = vunpack.c.l.b16 %v512
        %v716 = vunpack.c.l.b16 %v513
        %v717 = vunpack.c.l.b16 %v514
        %v718 = vunpack.c.l.b16 %v515
        %v719 = vunpack.c.l.b16 %v516
        %v720 = vunpack.c.l.b16 %v517
        %v721 = vunpack.c.l.b16 %v518
        %v722 = vunpack.c.l.b16 %v519
        %v723 = vunpack.c.l.b16 %v520
        %v724 = vunpack.c.l.b16 %v521
        %v725 = vunpack.c.l.b16 %v522
        %v726 = vunpack.c.l.b16 %v523
        %v727 = vunpack.c.l.b16 %v524
        %v728 = vunpack.c.l.b16 %v525
        %v729 = vunpack.c.l.b16 %v526
        %v730 = vunpack.c.l.b16 %v527
        %v731 = vunpack.c.l.b16 %v528
        %v732 = vunpack.c.l.b16 %v529
        %v733 = vunpack.c.l.b16 %v530
        %v734 = vunpack.c.l.b16 %v531
        %v735 = vunpack.c.l.b16 %v532
        %v736 = vunpack.c.l.b16 %v533
        %v737 = vunpack.c.l.b16 %v534
        %v738 = vunpack.c.l.b16 %v535
        %v739 = vunpack.c.l.b16 %v536
        %v740 = vunpack.c.l.b16 %v537
        %v741 = vunpack.c.l.b16 %v538
        %v742 = vpack.c.b16 %v645, %v644
        %v743 = vpack.c.b16 %v647, %v646
        %v744 = vpack.c.b16 %v649, %v648
        %v745 = vpack.c.b16 %v651, %v650
        %v746 = vpack.c.b16 %v653, %v652
        %v747 = vpack.c.b16 %v655, %v654
        %v748 = vpack.c.b16 %v657, %v656
        %v749 = vpack.c.b16 %v659, %v658
        %v750 = vpack.c.b16 %v661, %v660
        %v751 = vpack.c.b16 %v663, %v662
        %v752 = vpack.c.b16 %v665, %v664
        %v753 = vpack.c.b16 %v667, %v666
        %v754 = vpack.c.b16 %v669, %v668
        %v755 = vpack.c.b16 %v671, %v670
        %v756 = vpack.c.b16 %v673, %v672
        %v757 = vpack.c.b16 %v675, %v674
        %v758 = vpack.c.b16 %v677, %v676
        %v759 = vpack.c.b16 %v679, %v678
        %v760 = vpack.c.b16 %v681, %v680
        %v761 = vpack.c.b16 %v683, %v682
        %v762 = vpack.c.b16 %v685, %v684
        %v763 = vpack.c.b16 %v687, %v686
        %v764 = vpack.c.b16 %v689, %v688
        %v765 = vpack.c.b16 %v691, %v690
        %v766 = vpack.c.b16 %v693, %v692
        %v767 = vpack.c.b16 %v695, %v694
        %v768 = vpack.c.b16 %v697, %v696
        %v769 = vpack.c.b16 %v699, %v698
        %v770 = vpack.c.b16 %v701, %v700
        %v771 = vpack.c.b16 %v703, %v702
        %v772 = vpack.c.b16 %v705, %v704
        %v773 = vpack.c.b16 %v707, %v706
        %v774 = vpack.c.b16 %v709, %v708
        %v775 = vpack.c.b16 %v711, %v710
        %v776 = vpack.c.b16 %v713, %v712
        %v777 = vpack.c.b16 %v715, %v714
        %v778 = vpack.c.b16 %v717, %v716
        %v779 = vpack.c.b16 %v719, %v718
        %v780 = vpack.c.b16 %v721, %v720
        %v781 = vpack.c.b16 %v723, %v722
        %v782 = vpack.c.b16 %v725, %v724
        %v783 = vpack.c.b16 %v727, %v726
        %v784 = vpack.c.b16 %v729, %v728
        %v785 = vpack.c.b16 %v731, %v730
        %v786 = vpack.c.b16 %v733, %v732
        %v787 = vpack.c.b16 %v735, %v734
        %v788 = vpack.c.b16 %v737, %v736
        %v789 = vpack.c.b16 %v739, %v738
        %v790 = vpack.c.b16 %v741, %v740
        %vm840 = vcmask 130048
        %v842 = vsel %vm840, %v391, 0
        %v845 = vsel %vm840, %v398, 0
        %v848 = vsel %vm840, %v405, 0
        %v851 = vsel %vm840, %v412, 0
        %v854 = vsel %vm840, %v419, 0
        %v857 = vsel %vm840, %v426, 0
        %v860 = vsel %vm840, %v433, 0
        %v863 = vsel %vm840, %v440, 0
        %865 = vmatprep.subr.bf16.mxu0 0
        %866 = vmatpush1.bf16.msra.mxu0 %v742
        %867 = vmatprep.subr.bf16.mxu0 0
        %868 = vmatpush1.bf16.msra.mxu0 %v743
        %869 = vmatprep.subr.bf16.mxu0 0
        %870 = vmatpush1.bf16.msra.mxu0 %v744
        %871 = vmatprep.subr.bf16.mxu0 0
        %872 = vmatpush1.bf16.msra.mxu0 %v745
        %873 = vmatprep.subr.bf16.mxu0 0
        %874 = vmatpush1.bf16.msra.mxu0 %v746
        %875 = vmatprep.subr.bf16.mxu0 0
        %876 = vmatpush1.bf16.msra.mxu0 %v747
        %877 = vmatprep.subr.bf16.mxu0 0
        %878 = vmatpush1.bf16.msra.mxu0 %v748
        %879 = vmatprep.subr.bf16.mxu0 0
        %880 = vmatpush1.bf16.msra.mxu0 %v749
        %881 = vmatprep.subr.bf16.mxu0 0
        %882 = vmatpush1.bf16.msra.mxu0 %v750
        %883 = vmatprep.subr.bf16.mxu0 0
        %884 = vmatpush1.bf16.msra.mxu0 %v751
        %885 = vmatprep.subr.bf16.mxu0 0
        %886 = vmatpush1.bf16.msra.mxu0 %v752
        %887 = vmatprep.subr.bf16.mxu0 0
        %888 = vmatpush1.bf16.msra.mxu0 %v753
        %889 = vmatprep.subr.bf16.mxu0 0
        %890 = vmatpush1.bf16.msra.mxu0 %v754
        %891 = vmatprep.subr.bf16.mxu0 0
        %892 = vmatpush1.bf16.msra.mxu0 %v755
        %893 = vmatprep.subr.bf16.mxu0 0
        %894 = vmatpush1.bf16.msra.mxu0 %v756
        %895 = vmatprep.subr.bf16.mxu0 0
        %896 = vmatpush1.bf16.msra.mxu0 %v757
        %897 = vmatprep.mubr.bf16.mxu0 %v386
        %898 = vmatmul.mubr.bf16.gmra.mrb[0].mxu0 %v385
        %v899 = vpop.f32.mrb[0].mxu0
        %v900 = vadd.f32 %v544, %v899
        %v901 = vpop.f32.mrb[0].mxu0
        %v902 = vpop.f32.mrb[0].mxu0
        %v903 = vadd.f32 %v544, %v902
        %v904 = vpop.f32.mrb[0].mxu0
        %905 = vmatprep.mubr.bf16.mxu0 %v393
        %906 = vmatmul.mubr.bf16.gmra.mrb[0].mxu0 %v392
        %v907 = vpop.f32.mrb[0].mxu0
        %v908 = vadd.f32 %v544, %v907
        %v909 = vpop.f32.mrb[0].mxu0
        %v910 = vpop.f32.mrb[0].mxu0
        %v911 = vadd.f32 %v544, %v910
        %v912 = vpop.f32.mrb[0].mxu0
        %913 = vmatprep.mubr.bf16.mxu0 %v400
        %914 = vmatmul.mubr.bf16.gmra.mrb[0].mxu0 %v399
        %v915 = vpop.f32.mrb[0].mxu0
        %v916 = vadd.f32 %v544, %v915
        %v917 = vpop.f32.mrb[0].mxu0
        %v918 = vpop.f32.mrb[0].mxu0
        %v919 = vadd.f32 %v544, %v918
        %v920 = vpop.f32.mrb[0].mxu0
        %921 = vmatprep.mubr.bf16.mxu0 %v407
        %922 = vmatmul.mubr.bf16.gmra.mrb[0].mxu0 %v406
        %v923 = vpop.f32.mrb[0].mxu0
        %v924 = vadd.f32 %v544, %v923
        %v925 = vpop.f32.mrb[0].mxu0
        %v926 = vpop.f32.mrb[0].mxu0
        %v927 = vadd.f32 %v544, %v926
        %v928 = vpop.f32.mrb[0].mxu0
        %929 = vmatprep.mubr.bf16.mxu0 %v414
        %930 = vmatmul.mubr.bf16.gmra.mrb[0].mxu0 %v413
        %v931 = vpop.f32.mrb[0].mxu0
        %v932 = vadd.f32 %v544, %v931
        %v933 = vpop.f32.mrb[0].mxu0
        %v934 = vpop.f32.mrb[0].mxu0
        %v935 = vadd.f32 %v544, %v934
        %v936 = vpop.f32.mrb[0].mxu0
        %937 = vmatprep.mubr.bf16.mxu0 %v421
        %938 = vmatmul.mubr.bf16.gmra.mrb[0].mxu0 %v420
        %v939 = vpop.f32.mrb[0].mxu0
        %v940 = vadd.f32 %v544, %v939
        %v941 = vpop.f32.mrb[0].mxu0
        %v942 = vpop.f32.mrb[0].mxu0
        %v943 = vadd.f32 %v544, %v942
        %v944 = vpop.f32.mrb[0].mxu0
        %945 = vmatprep.mubr.bf16.mxu0 %v428
        %946 = vmatmul.mubr.bf16.gmra.mrb[0].mxu0 %v427
        %v947 = vpop.f32.mrb[0].mxu0
        %v948 = vadd.f32 %v544, %v947
        %v949 = vpop.f32.mrb[0].mxu0
        %v950 = vpop.f32.mrb[0].mxu0
        %v951 = vadd.f32 %v544, %v950
        %v952 = vpop.f32.mrb[0].mxu0
        %953 = vmatprep.mubr.bf16.mxu0 %v435
        %954 = vmatmul.mubr.bf16.gmra.mrb[0].mxu0 %v434
        %v955 = vpop.f32.mrb[0].mxu0
        %v956 = vadd.f32 %v544, %v955
        %v957 = vpop.f32.mrb[0].mxu0
        %v958 = vpop.f32.mrb[0].mxu0
        %v959 = vadd.f32 %v544, %v958
        %v960 = vpop.f32.mrb[0].mxu0
        %961 = vdwg.mxu0
        %962 = vmatprep.subr.bf16.mxu0 0
        %963 = vmatpush1.bf16.msra.mxu0 %v758
        %964 = vmatprep.subr.bf16.mxu0 0
        %965 = vmatpush1.bf16.msra.mxu0 %v759
        %966 = vmatprep.subr.bf16.mxu0 0
        %967 = vmatpush1.bf16.msra.mxu0 %v760
        %968 = vmatprep.subr.bf16.mxu0 0
        %969 = vmatpush1.bf16.msra.mxu0 %v761
        %970 = vmatprep.subr.bf16.mxu0 0
        %971 = vmatpush1.bf16.msra.mxu0 %v762
        %972 = vmatprep.subr.bf16.mxu0 0
        %973 = vmatpush1.bf16.msra.mxu0 %v763
        %974 = vmatprep.subr.bf16.mxu0 0
        %975 = vmatpush1.bf16.msra.mxu0 %v764
        %976 = vmatprep.subr.bf16.mxu0 0
        %977 = vmatpush1.bf16.msra.mxu0 %v765
        %978 = vmatprep.subr.bf16.mxu0 0
        %979 = vmatpush1.bf16.msra.mxu0 %v766
        %980 = vmatprep.subr.bf16.mxu0 0
        %981 = vmatpush1.bf16.msra.mxu0 %v767
        %982 = vmatprep.subr.bf16.mxu0 0
        %983 = vmatpush1.bf16.msra.mxu0 %v768
        %984 = vmatprep.subr.bf16.mxu0 0
        %985 = vmatpush1.bf16.msra.mxu0 %v769
        %986 = vmatprep.subr.bf16.mxu0 0
        %987 = vmatpush1.bf16.msra.mxu0 %v770
        %988 = vmatprep.subr.bf16.mxu0 0
        %989 = vmatpush1.bf16.msra.mxu0 %v771
        %990 = vmatprep.subr.bf16.mxu0 0
        %991 = vmatpush1.bf16.msra.mxu0 %v772
        %992 = vmatprep.subr.bf16.mxu0 0
        %993 = vmatpush1.bf16.msra.mxu0 %v773
        %994 = vmatprep.mubr.bf16.mxu0 %v388
        %995 = vmatmul.mubr.bf16.gmra.mrb[0].mxu0 %v387
        %v996 = vpop.f32.mrb[0].mxu0
        %v997 = vadd.f32 %v900, %v996
        %v998 = vpop.f32.mrb[0].mxu0
        %v999 = vpop.f32.mrb[0].mxu0
        %v1000 = vadd.f32 %v903, %v999
        %v1001 = vpop.f32.mrb[0].mxu0
        %1002 = vmatprep.mubr.bf16.mxu0 %v395
        %1003 = vmatmul.mubr.bf16.gmra.mrb[0].mxu0 %v394
        %v1004 = vpop.f32.mrb[0].mxu0
        %v1005 = vadd.f32 %v908, %v1004
        %v1006 = vpop.f32.mrb[0].mxu0
        %v1007 = vpop.f32.mrb[0].mxu0
        %v1008 = vadd.f32 %v911, %v1007
        %v1009 = vpop.f32.mrb[0].mxu0
        %1010 = vmatprep.mubr.bf16.mxu0 %v402
        %1011 = vmatmul.mubr.bf16.gmra.mrb[0].mxu0 %v401
        %v1012 = vpop.f32.mrb[0].mxu0
        %v1013 = vadd.f32 %v916, %v1012
        %v1014 = vpop.f32.mrb[0].mxu0
        %v1015 = vpop.f32.mrb[0].mxu0
        %v1016 = vadd.f32 %v919, %v1015
        %v1017 = vpop.f32.mrb[0].mxu0
        %1018 = vmatprep.mubr.bf16.mxu0 %v409
        %1019 = vmatmul.mubr.bf16.gmra.mrb[0].mxu0 %v408
        %v1020 = vpop.f32.mrb[0].mxu0
        %v1021 = vadd.f32 %v924, %v1020
        %v1022 = vpop.f32.mrb[0].mxu0
        %v1023 = vpop.f32.mrb[0].mxu0
        %v1024 = vadd.f32 %v927, %v1023
        %v1025 = vpop.f32.mrb[0].mxu0
        %1026 = vmatprep.mubr.bf16.mxu0 %v416
        %1027 = vmatmul.mubr.bf16.gmra.mrb[0].mxu0 %v415
        %v1028 = vpop.f32.mrb[0].mxu0
        %v1029 = vadd.f32 %v932, %v1028
        %v1030 = vpop.f32.mrb[0].mxu0
        %v1031 = vpop.f32.mrb[0].mxu0
        %v1032 = vadd.f32 %v935, %v1031
        %v1033 = vpop.f32.mrb[0].mxu0
        %1034 = vmatprep.mubr.bf16.mxu0 %v423
        %1035 = vmatmul.mubr.bf16.gmra.mrb[0].mxu0 %v422
        %v1036 = vpop.f32.mrb[0].mxu0
        %v1037 = vadd.f32 %v940, %v1036
        %v1038 = vpop.f32.mrb[0].mxu0
        %v1039 = vpop.f32.mrb[0].mxu0
        %v1040 = vadd.f32 %v943, %v1039
        %v1041 = vpop.f32.mrb[0].mxu0
        %1042 = vmatprep.mubr.bf16.mxu0 %v430
        %1043 = vmatmul.mubr.bf16.gmra.mrb[0].mxu0 %v429
        %v1044 = vpop.f32.mrb[0].mxu0
        %v1045 = vadd.f32 %v948, %v1044
        %v1046 = vpop.f32.mrb[0].mxu0
        %v1047 = vpop.f32.mrb[0].mxu0
        %v1048 = vadd.f32 %v951, %v1047
        %v1049 = vpop.f32.mrb[0].mxu0
        %1050 = vmatprep.mubr.bf16.mxu0 %v437
        %1051 = vmatmul.mubr.bf16.gmra.mrb[0].mxu0 %v436
        %v1052 = vpop.f32.mrb[0].mxu0
        %v1053 = vadd.f32 %v956, %v1052
        %v1054 = vpop.f32.mrb[0].mxu0
        %v1055 = vpop.f32.mrb[0].mxu0
        %v1056 = vadd.f32 %v959, %v1055
        %v1057 = vpop.f32.mrb[0].mxu0
        %1058 = vdwg.mxu0
        %1059 = vmatprep.subr.bf16.mxu0 0
        %1060 = vmatpush1.bf16.msra.mxu0 %v774
        %1061 = vmatprep.subr.bf16.mxu0 0
        %1062 = vmatpush1.bf16.msra.mxu0 %v775
        %1063 = vmatprep.subr.bf16.mxu0 0
        %1064 = vmatpush1.bf16.msra.mxu0 %v776
        %1065 = vmatprep.subr.bf16.mxu0 0
        %1066 = vmatpush1.bf16.msra.mxu0 %v777
        %1067 = vmatprep.subr.bf16.mxu0 0
        %1068 = vmatpush1.bf16.msra.mxu0 %v778
        %1069 = vmatprep.subr.bf16.mxu0 0
        %1070 = vmatpush1.bf16.msra.mxu0 %v779
        %1071 = vmatprep.subr.bf16.mxu0 0
        %1072 = vmatpush1.bf16.msra.mxu0 %v780
        %1073 = vmatprep.subr.bf16.mxu0 0
        %1074 = vmatpush1.bf16.msra.mxu0 %v781
        %1075 = vmatprep.subr.bf16.mxu0 0
        %1076 = vmatpush1.bf16.msra.mxu0 %v782
        %1077 = vmatprep.subr.bf16.mxu0 0
        %1078 = vmatpush1.bf16.msra.mxu0 %v783
        %1079 = vmatprep.subr.bf16.mxu0 0
        %1080 = vmatpush1.bf16.msra.mxu0 %v784
        %1081 = vmatprep.subr.bf16.mxu0 0
        %1082 = vmatpush1.bf16.msra.mxu0 %v785
        %1083 = vmatprep.subr.bf16.mxu0 0
        %1084 = vmatpush1.bf16.msra.mxu0 %v786
        %1085 = vmatprep.subr.bf16.mxu0 0
        %1086 = vmatpush1.bf16.msra.mxu0 %v787
        %1087 = vmatprep.subr.bf16.mxu0 0
        %1088 = vmatpush1.bf16.msra.mxu0 %v788
        %1089 = vmatprep.subr.bf16.mxu0 0
        %1090 = vmatpush1.bf16.msra.mxu0 %v789
        %1091 = vmatprep.mubr.bf16.mxu0 %v390
        %1092 = vmatmul.mubr.bf16.gmra.mrb[0].mxu0 %v389
        %v1093 = vpop.f32.mrb[0].mxu0
        %v1094 = vadd.f32 %v997, %v1093
        %v1095 = vpop.f32.mrb[0].mxu0
        %v1096 = vpop.f32.mrb[0].mxu0
        %v1097 = vadd.f32 %v1000, %v1096
        %v1098 = vpop.f32.mrb[0].mxu0
        %1099 = vmatprep.mubr.bf16.mxu0 %v397
        %1100 = vmatmul.mubr.bf16.gmra.mrb[0].mxu0 %v396
        %v1101 = vpop.f32.mrb[0].mxu0
        %v1102 = vadd.f32 %v1005, %v1101
        %v1103 = vpop.f32.mrb[0].mxu0
        %v1104 = vpop.f32.mrb[0].mxu0
        %v1105 = vadd.f32 %v1008, %v1104
        %v1106 = vpop.f32.mrb[0].mxu0
        %1107 = vmatprep.mubr.bf16.mxu0 %v404
        %1108 = vmatmul.mubr.bf16.gmra.mrb[0].mxu0 %v403
        %v1109 = vpop.f32.mrb[0].mxu0
        %v1110 = vadd.f32 %v1013, %v1109
        %v1111 = vpop.f32.mrb[0].mxu0
        %v1112 = vpop.f32.mrb[0].mxu0
        %v1113 = vadd.f32 %v1016, %v1112
        %v1114 = vpop.f32.mrb[0].mxu0
        %1115 = vmatprep.mubr.bf16.mxu0 %v411
        %1116 = vmatmul.mubr.bf16.gmra.mrb[0].mxu0 %v410
        %v1117 = vpop.f32.mrb[0].mxu0
        %v1118 = vadd.f32 %v1021, %v1117
        %v1119 = vpop.f32.mrb[0].mxu0
        %v1120 = vpop.f32.mrb[0].mxu0
        %v1121 = vadd.f32 %v1024, %v1120
        %v1122 = vpop.f32.mrb[0].mxu0
        %1123 = vmatprep.mubr.bf16.mxu0 %v418
        %1124 = vmatmul.mubr.bf16.gmra.mrb[0].mxu0 %v417
        %v1125 = vpop.f32.mrb[0].mxu0
        %v1126 = vadd.f32 %v1029, %v1125
        %v1127 = vpop.f32.mrb[0].mxu0
        %v1128 = vpop.f32.mrb[0].mxu0
        %v1129 = vadd.f32 %v1032, %v1128
        %v1130 = vpop.f32.mrb[0].mxu0
        %1131 = vmatprep.mubr.bf16.mxu0 %v425
        %1132 = vmatmul.mubr.bf16.gmra.mrb[0].mxu0 %v424
        %v1133 = vpop.f32.mrb[0].mxu0
        %v1134 = vadd.f32 %v1037, %v1133
        %v1135 = vpop.f32.mrb[0].mxu0
        %v1136 = vpop.f32.mrb[0].mxu0
        %v1137 = vadd.f32 %v1040, %v1136
        %v1138 = vpop.f32.mrb[0].mxu0
        %1139 = vmatprep.mubr.bf16.mxu0 %v432
        %1140 = vmatmul.mubr.bf16.gmra.mrb[0].mxu0 %v431
        %v1141 = vpop.f32.mrb[0].mxu0
        %v1142 = vadd.f32 %v1045, %v1141
        %v1143 = vpop.f32.mrb[0].mxu0
        %v1144 = vpop.f32.mrb[0].mxu0
        %v1145 = vadd.f32 %v1048, %v1144
        %v1146 = vpop.f32.mrb[0].mxu0
        %1147 = vmatprep.mubr.bf16.mxu0 %v439
        %1148 = vmatmul.mubr.bf16.gmra.mrb[0].mxu0 %v438
        %v1149 = vpop.f32.mrb[0].mxu0
        %v1150 = vadd.f32 %v1053, %v1149
        %v1151 = vpop.f32.mrb[0].mxu0
        %v1152 = vpop.f32.mrb[0].mxu0
        %v1153 = vadd.f32 %v1056, %v1152
        %v1154 = vpop.f32.mrb[0].mxu0
        %1155 = vdwg.mxu0
        %1156 = vmatprep.subr.bf16.mxu0 0
        %1157 = vmatpush1.bf16.msra.mxu0 %v790
        %1158 = vmatprep.subr.bf16.mxu0 0
        %1159 = vmatpush1.bf16.msra.mxu0 0
        %1160 = vmatprep.subr.bf16.mxu0 0
        %1161 = vmatpush1.bf16.msra.mxu0 0
        %1162 = vmatprep.subr.bf16.mxu0 0
        %1163 = vmatpush1.bf16.msra.mxu0 0
        %1164 = vmatprep.subr.bf16.mxu0 0
        %1165 = vmatpush1.bf16.msra.mxu0 0
        %1166 = vmatprep.subr.bf16.mxu0 0
        %1167 = vmatpush1.bf16.msra.mxu0 0
        %1168 = vmatprep.subr.bf16.mxu0 0
        %1169 = vmatpush1.bf16.msra.mxu0 0
        %1170 = vmatprep.subr.bf16.mxu0 0
        %1171 = vmatpush1.bf16.msra.mxu0 0
        %1172 = vmatprep.subr.bf16.mxu0 0
        %1173 = vmatpush1.bf16.msra.mxu0 0
        %1174 = vmatprep.subr.bf16.mxu0 0
        %1175 = vmatpush1.bf16.msra.mxu0 0
        %1176 = vmatprep.subr.bf16.mxu0 0
        %1177 = vmatpush1.bf16.msra.mxu0 0
        %1178 = vmatprep.subr.bf16.mxu0 0
        %1179 = vmatpush1.bf16.msra.mxu0 0
        %1180 = vmatprep.subr.bf16.mxu0 0
        %1181 = vmatpush1.bf16.msra.mxu0 0
        %1182 = vmatprep.subr.bf16.mxu0 0
        %1183 = vmatpush1.bf16.msra.mxu0 0
        %1184 = vmatprep.subr.bf16.mxu0 0
        %1185 = vmatpush1.bf16.msra.mxu0 0
        %1186 = vmatprep.subr.bf16.mxu0 0
        %1187 = vmatpush1.bf16.msra.mxu0 0
        %1188 = vmatprep.mubr.bf16.mxu0 0
        %1189 = vmatmul.mubr.bf16.gmra.mrb[0].mxu0 %v842
        %v1190 = vpop.f32.mrb[0].mxu0
        %v1191 = vadd.f32 %v1094, %v1190
        %v1192 = vpop.f32.mrb[0].mxu0
        %v1193 = vpop.f32.mrb[0].mxu0
        %v1194 = vadd.f32 %v1097, %v1193
        %v1195 = vpop.f32.mrb[0].mxu0
        %1196 = vmatprep.mubr.bf16.mxu0 0
        %1197 = vmatmul.mubr.bf16.gmra.mrb[0].mxu0 %v845
        %v1198 = vpop.f32.mrb[0].mxu0
        %v1199 = vadd.f32 %v1102, %v1198
        %v1200 = vpop.f32.mrb[0].mxu0
        %v1201 = vpop.f32.mrb[0].mxu0
        %v1202 = vadd.f32 %v1105, %v1201
        %v1203 = vpop.f32.mrb[0].mxu0
        %1204 = vmatprep.mubr.bf16.mxu0 0
        %1205 = vmatmul.mubr.bf16.gmra.mrb[0].mxu0 %v848
        %v1206 = vpop.f32.mrb[0].mxu0
        %v1207 = vadd.f32 %v1110, %v1206
        %v1208 = vpop.f32.mrb[0].mxu0
        %v1209 = vpop.f32.mrb[0].mxu0
        %v1210 = vadd.f32 %v1113, %v1209
        %v1211 = vpop.f32.mrb[0].mxu0
        %1212 = vmatprep.mubr.bf16.mxu0 0
        %1213 = vmatmul.mubr.bf16.gmra.mrb[0].mxu0 %v851
        %v1214 = vpop.f32.mrb[0].mxu0
        %v1215 = vadd.f32 %v1118, %v1214
        %v1216 = vpop.f32.mrb[0].mxu0
        %v1217 = vpop.f32.mrb[0].mxu0
        %v1218 = vadd.f32 %v1121, %v1217
        %v1219 = vpop.f32.mrb[0].mxu0
        %1220 = vmatprep.mubr.bf16.mxu0 0
        %1221 = vmatmul.mubr.bf16.gmra.mrb[0].mxu0 %v854
        %v1222 = vpop.f32.mrb[0].mxu0
        %v1223 = vadd.f32 %v1126, %v1222
        %v1224 = vpop.f32.mrb[0].mxu0
        %v1225 = vpop.f32.mrb[0].mxu0
        %v1226 = vadd.f32 %v1129, %v1225
        %v1227 = vpop.f32.mrb[0].mxu0
        %1228 = vmatprep.mubr.bf16.mxu0 0
        %1229 = vmatmul.mubr.bf16.gmra.mrb[0].mxu0 %v857
        %v1230 = vpop.f32.mrb[0].mxu0
        %v1231 = vadd.f32 %v1134, %v1230
        %v1232 = vpop.f32.mrb[0].mxu0
        %v1233 = vpop.f32.mrb[0].mxu0
        %v1234 = vadd.f32 %v1137, %v1233
        %v1235 = vpop.f32.mrb[0].mxu0
        %1236 = vmatprep.mubr.bf16.mxu0 0
        %1237 = vmatmul.mubr.bf16.gmra.mrb[0].mxu0 %v860
        %v1238 = vpop.f32.mrb[0].mxu0
        %v1239 = vadd.f32 %v1142, %v1238
        %v1240 = vpop.f32.mrb[0].mxu0
        %v1241 = vpop.f32.mrb[0].mxu0
        %v1242 = vadd.f32 %v1145, %v1241
        %v1243 = vpop.f32.mrb[0].mxu0
        %1244 = vmatprep.mubr.bf16.mxu0 0
        %1245 = vmatmul.mubr.bf16.gmra.mrb[0].mxu0 %v863
        %v1246 = vpop.f32.mrb[0].mxu0
        %v1247 = vadd.f32 %v1150, %v1246
        %v1248 = vpop.f32.mrb[0].mxu0
        %v1249 = vpop.f32.mrb[0].mxu0
        %v1250 = vadd.f32 %v1153, %v1249
        %v1251 = vpop.f32.mrb[0].mxu0
        %1252 = vdwg.mxu0
        %v1253 = vmax.f32 %v1191, 0.0
        %v1254 = vmax.f32 %v1194, 0.0
        %v1255 = vmax.f32 %v1199, 0.0
        %v1256 = vmax.f32 %v1202, 0.0
        %v1257 = vmax.f32 %v1207, 0.0
        %v1258 = vmax.f32 %v1210, 0.0
        %v1259 = vmax.f32 %v1215, 0.0
        %v1260 = vmax.f32 %v1218, 0.0
        %v1261 = vmax.f32 %v1223, 0.0
        %v1262 = vmax.f32 %v1226, 0.0
        %v1263 = vmax.f32 %v1231, 0.0
        %v1264 = vmax.f32 %v1234, 0.0
        %v1265 = vmax.f32 %v1239, 0.0
        %v1266 = vmax.f32 %v1242, 0.0
        %v1267 = vmax.f32 %v1247, 0.0
        %v1268 = vmax.f32 %v1250, 0.0
        %v1269 = vld [vmem:[%s3] sm:$0x1]
        %s1270 = sld [smem:[#allocation2]]
        %v1271 = vstv %s1270
        %1272 = vmatprep.subr.mxu0 0.0
        %1273 = vmatpush1.xpose.msra.mxu0 %v1253
        %1274 = vmatprep.subr.mxu0 0.0
        %1275 = vmatpush1.xpose.msra.mxu0 %v1254
        %1276 = vmatprep.subr.mxu0 0.0
        %1277 = vmatpush1.xpose.msra.mxu0 %v1255
        %1278 = vmatprep.subr.mxu0 0.0
        %1279 = vmatpush1.xpose.msra.mxu0 %v1256
        %1280 = vmatprep.subr.mxu0 0.0
        %1281 = vmatpush1.xpose.msra.mxu0 %v1257
        %1282 = vmatprep.subr.mxu0 0.0
        %1283 = vmatpush1.xpose.msra.mxu0 %v1258
        %1284 = vmatprep.subr.mxu0 0.0
        %1285 = vmatpush1.xpose.msra.mxu0 %v1259
        %1286 = vmatprep.subr.mxu0 0.0
        %1287 = vmatpush1.xpose.msra.mxu0 %v1260
        %1288 = vmatprep.subr.mxu0 0.0
        %1289 = vmatpush1.xpose.msra.mxu0 %v1261
        %1290 = vmatprep.subr.mxu0 0.0
        %1291 = vmatpush1.xpose.msra.mxu0 %v1262
        %1292 = vmatprep.subr.mxu0 0.0
        %1293 = vmatpush1.xpose.msra.mxu0 %v1263
        %1294 = vmatprep.subr.mxu0 0.0
        %1295 = vmatpush1.xpose.msra.mxu0 %v1264
        %1296 = vmatprep.subr.mxu0 0.0
        %1297 = vmatpush1.xpose.msra.mxu0 %v1265
        %1298 = vmatprep.subr.mxu0 0.0
        %1299 = vmatpush1.xpose.msra.mxu0 %v1266
        %1300 = vmatprep.subr.mxu0 0.0
        %1301 = vmatpush1.xpose.msra.mxu0 %v1267
        %1302 = vmatprep.subr.mxu0 0.0
        %1303 = vmatpush1.xpose.msra.mxu0 %v1268
        %1304 = vmatprep.subr.mxu0 0.0
        %1305 = vmatpush1.xpose.msra.mxu0 0.0
        %1306 = vmatprep.subr.mxu0 0.0
        %1307 = vmatpush1.xpose.msra.mxu0 0.0
        %1308 = vmatprep.subr.mxu0 0.0
        %1309 = vmatpush1.xpose.msra.mxu0 0.0
        %1310 = vmatprep.subr.mxu0 0.0
        %1311 = vmatpush1.xpose.msra.mxu0 0.0
        %1312 = vmatprep.subr.mxu0 0.0
        %1313 = vmatpush1.xpose.msra.mxu0 0.0
        %1314 = vmatprep.subr.mxu0 0.0
        %1315 = vmatpush1.xpose.msra.mxu0 0.0
        %1316 = vmatprep.subr.mxu0 0.0
        %1317 = vmatpush1.xpose.msra.mxu0 0.0
        %1318 = vmatprep.subr.mxu0 0.0
        %1319 = vmatpush1.xpose.msra.mxu0 0.0
        %1320 = vmatprep.subr.mxu0 0.0
        %1321 = vmatpush1.xpose.msra.mxu0 0.0
        %1322 = vmatprep.subr.mxu0 0.0
        %1323 = vmatpush1.xpose.msra.mxu0 0.0
        %1324 = vmatprep.subr.mxu0 0.0
        %1325 = vmatpush1.xpose.msra.mxu0 0.0
        %1326 = vmatprep.subr.mxu0 0.0
        %1327 = vmatpush1.xpose.msra.mxu0 0.0
        %1328 = vmatprep.subr.mxu0 0.0
        %1329 = vmatpush1.xpose.msra.mxu0 0.0
        %1330 = vmatprep.subr.mxu0 0.0
        %1331 = vmatpush1.xpose.msra.mxu0 0.0
        %1332 = vmatprep.subr.mxu0 0.0
        %1333 = vmatpush1.xpose.msra.mxu0 0.0
        %1334 = vmatprep.subr.mxu0 0.0
        %1335 = vmatpush1.xpose.msra.mxu0 0.0
        %1336 = vmatprep.mubr.f32.mxu0 0.0
        %1337 = vmatmul.mubr.f32.gmra.mrb[0].mxu0 %v1269
        %v1338 = vpop.f32.mrb[0].mxu0
        %v1339 = vadd.f32 %v1271, %v1338
        %v1340 = vpop.f32.mrb[0].mxu0
        %1341 = vdwg.mxu0
        %v1342 = vsub.f32 0.0, %v1339
        %v1343 = vmul.f32 %v1342, 1.442695
        %v1344 = vpow.pop %v1343
        %v1345 = vadd.f32 %v1344, 1.0
        %v1346 = vrcp.pop %v1345
        %1347 = vst [vmem:[%s265] sm:$0x1] %v1346
        %s1348 = sand.u32 %s142, 1
        %s1349 = scalar_lea.sflag [#allocation5], %s1348
        %s1350 = sand.u32 %s142, 1
        %s1351 = scalar_lea.vmem [#allocation8], %s1350
        // Predicated region
        $region49: #{tpu_custom_call.1} parent=39 // pred_check
          %p1352 = pneg %p152
        $region50: #{tpu_custom_call.1} parent=39 // pred_check_branch
          %1354 = sbr.rel (%p1352) target = $region52
        $region51: #{tpu_custom_call.1} parent=39 // pred_region
          %s1356 = ssub.s32 16, 16
          %1357 = vsyncadd %s1349, %s1356
          %s1358 = smul.addr %s24, 16
          %s1359 = scalar_lea.hbm %s5, %s1358
          %s1361 = sshll.u32 %s1351, 4
          %s1362 = int_to_ptr.vmem [resolvable:$true] %s1361
          %1364 = dma.vmem_to_hbm [thread:$0]  %s1362, 16, %s1359, %s1349
        $region52: #{tpu_custom_call.1} parent=39 // pred_fallthru
          _
      $region40: #{tpu_custom_call.1} parent=5 // pred_fallthru
        _
      %p1365 = scmp.le.s32.totalorder 2, %s19
      // Predicated region
      $region53: #{tpu_custom_call.1} parent=5 // pred_check
        %p1366 = pneg %p1365
      $region54: #{tpu_custom_call.1} parent=5 // pred_check_branch
        %1368 = sbr.rel (%p1366) target = $region56
      $region55: #{tpu_custom_call.1} parent=5 // pred_region
        %s1369 = ssub.s32 %s19, 2
        // Predicated region
        $region57: #{tpu_custom_call.1} parent=55 // pred_check
          %p1370 = pneg %p158
        $region58: #{tpu_custom_call.1} parent=55 // pred_check_branch
          %1372 = sbr.rel (%p1370) target = $region60
        $region59: #{tpu_custom_call.1} parent=55 // pred_region
          %s1373 = sand.u32 %s143, 1
          %s1374 = scalar_lea.sflag [#allocation5], %s1373
          %s1375 = sand.u32 %s143, 1
          %s1376 = scalar_lea.vmem [#allocation8], %s1375
          %1377 = dma.done %s1374, 16
        $region60: #{tpu_custom_call.1} parent=55 // pred_fallthru
          _
      $region56: #{tpu_custom_call.1} parent=5 // pred_fallthru
        _
    $region6: #{tpu_custom_call.1} parent=1 // loop_footer
      %s23 = sadd.s32 1, %s19
    $region7: #{tpu_custom_call.1} parent=1 // loop_footer_branch
      %18 = sbr.rel target = $region3
    $region8: #{tpu_custom_call.1} parent=1 // loop_exit
      _
    %1378 = vsyncpa [#allocation4], 1
    %s1379 = scalar_lea.sflag [#allocation4], 1
    %1380 = vsyncpa %s1379, 1
    %1381 = vsyncpa [#allocation7], 1
    %1382 = vsyncpa [#allocation5], 1
    %s1383 = scalar_lea.sflag [#allocation5], 1
    %1384 = vsyncpa %s1383, 1

</llo_original>
